<compile_context>
chip_gen: v5e
topology: v5e:2x2
jax: 0.10.0
libtpu: 0.0.40
codegen_flags: <defaults>
</compile_context>

<pallas_src>
import math
from functools import partial

import jax
import jax.numpy as jnp
from jax import lax
from jax.experimental import pallas as pl
from jax.experimental.pallas import tpu as pltpu


# ---------------------------------------------------------------------------
# elementwise helpers (match PyTorch semantics)
# ---------------------------------------------------------------------------
def _softplus(x):
    # torch.nn.Softplus: beta=1, threshold=20 -> x for x > 20
    return jnp.where(x > 20.0, x, jnp.log1p(jnp.exp(jnp.minimum(x, 20.0))))


def _gelu(x):
    # torch.nn.GELU default: exact erf-based GELU
    return 0.5 * x * (1.0 + lax.erf(x * (1.0 / math.sqrt(2.0))))


# bias-slab row indices (static)
_B_QKV, _B_F1, _B_F2, _B_O, _B_1, _B_2, _B_G1, _B_BE1, _B_G2, _B_BE2 = range(10)


# ---------------------------------------------------------------------------
# Pallas kernel: whole encoder.  grid = (batch_tiles, layers); activation carried
# across the layer axis in VMEM scratch, output written only at the last layer.
# ---------------------------------------------------------------------------
def _encoder_kernel(src_ref, mask_ref, w_ref, b_ref, out_ref, x_sc, *,
                    Bt, L, E, H, F, hidden, n_layers, row_off, compute_dtype):
    HF = H * F
    BL = Bt * L
    cdt = compute_dtype
    layer = pl.program_id(1)

    # Seed the VMEM-resident carry from the input at layer 0 of each batch tile
    # (grid order: all layers of a batch tile, then the next tile).
    @pl.when(layer == 0)
    def _():
        x_sc[...] = src_ref[...].reshape(BL, E)

    x2 = x_sc[...]                                           # (BL, E), f32

    o_qkv, o_f1, o_f2, o_wo, o_w1, o_w2 = row_off

    def w(off, rows, cols):                                  # static weight-slab slice
        return w_ref[0, off:off + rows, 0:cols]

    def brow(row, cols):                                     # static bias-slab slice
        return b_ref[0, row:row + 1, 0:cols]

    def mm(a, wmat):                                         # MXU matmul, f32 accumulate
        return jnp.dot(a.astype(cdt), wmat, preferred_element_type=jnp.float32)

    # --- fused Q/K/V projection: one (BL, E) @ (E, 3E) matmul -----------------
    qkv = mm(x2, w(o_qkv, E, 3 * E)) + brow(_B_QKV, 3 * E)   # (BL, 3E)
    v2 = qkv[:, 2 * E:]                                      # (BL, E)

    # --- learnable kernel feature map, batched over {Q, K} x heads ------------
    # Block-diagonal weights map (BL, 3E) -> (BL, 2*H*F) lane-dense; the V rows of
    # wf1_big are zero so no explicit Q/K slicing is needed.
    h1 = jnp.maximum(mm(qkv, w(o_f1, 3 * E, 2 * HF)) + brow(_B_F1, 2 * HF), 0.0)
    feat = _softplus(mm(h1, w(o_f2, 2 * HF, 2 * HF)) + brow(_B_F2, 2 * HF))
    qf = feat[:, :HF].reshape(Bt, L, HF)
    kf = feat[:, HF:].reshape(Bt, L, HF)
    v3 = v2.reshape(Bt, L, E)

    # --- linear attention: single batched contraction + block-diag head mask --
    # kv[b,f,d] = sum_l kf[b,l,f] * v[b,l,d]; the mask zeroes cross-head terms, so
    # qf @ (kv * mask) equals the per-head 'blhd,bhde->blhe' einsum.
    kv = jnp.einsum('blf,bld->bfd', kf.astype(cdt), v3.astype(cdt),
                    preferred_element_type=jnp.float32)      # (Bt, HF, E)
    kv = kv * mask_ref[...][None]
    qkv_out = jnp.einsum('blf,bfd->bld', qf.astype(cdt), kv.astype(cdt),
                         preferred_element_type=jnp.float32)  # (Bt, L, E)
    attn = mm(qkv_out.reshape(BL, E), w(o_wo, E, E)) + brow(_B_O, E)

    # --- residual + LayerNorm (f32) -------------------------------------------
    def layer_norm(z, g_row, b_row):
        mu = jnp.mean(z, axis=-1, keepdims=True)
        var = jnp.mean((z - mu) ** 2, axis=-1, keepdims=True)
        return (z - mu) * lax.rsqrt(var + 1e-5) * brow(g_row, E) + brow(b_row, E)

    x2 = layer_norm(x2 + attn, _B_G1, _B_BE1)

    # --- feed-forward (GELU) + residual + LayerNorm ----------------------------
    ff = mm(_gelu(mm(x2, w(o_w1, E, hidden)) + brow(_B_1, hidden)),
            w(o_w2, hidden, E)) + brow(_B_2, E)
    x2 = layer_norm(x2 + ff, _B_G2, _B_BE2)

    x_sc[...] = x2                                           # carry to next layer

    @pl.when(layer == n_layers - 1)
    def _():
        out_ref[...] = x2.reshape(Bt, L, E)                  # single HBM store


# ---------------------------------------------------------------------------
# Wrapper helpers
# ---------------------------------------------------------------------------
def _head_mask(HF, E, F, Dh):
    rh = jnp.arange(HF) // F
    ch = jnp.arange(E) // Dh
    return (rh[:, None] == ch[None, :]).astype(jnp.float32)


def _pad8(n):
    return ((n + 7) // 8) * 8


def _prepare_params(layer_params, E, H, F, Dh, hidden, compute_dtype):
    """Fuse QKV, build block-diagonal feature-map weights, pack 2 slabs per layer."""
    HF = H * F
    LW = ((max(3 * E, 2 * HF, E, hidden) + 127) // 128) * 128   # common lane width

    sect_rows = [_pad8(E), _pad8(3 * E), _pad8(2 * HF),
                 _pad8(E), _pad8(E), _pad8(hidden)]
    row_off, off = [], 0
    for r in sect_rows:
        row_off.append(off)
        off += r
    R = off

    w_slabs, b_slabs = [], []
    for p in layer_params:
        (wq, bq, wk, bk, wv, bv, wo, bo,
         wf1, bf1, wf2, bf2, w1, b1, w2, b2, g1, be1, g2, be2) = p

        wqkv = jnp.concatenate([wq, wk, wv], axis=1)            # (E, 3E)
        bqkv = jnp.concatenate([bq, bk, bv], axis=1)            # (1, 3E)

        # Block-diagonal feature-map weights covering Q and K of all heads at once.
        wf1_big = jnp.zeros((3 * E, 2 * HF), jnp.float32)       # V rows stay zero
        for t in range(2):                                      # 0 -> Q, 1 -> K
            for h in range(H):
                wf1_big = wf1_big.at[
                    t * E + h * Dh: t * E + (h + 1) * Dh,
                    t * HF + h * F: t * HF + (h + 1) * F].set(wf1)
        bf1_big = jnp.tile(bf1, (1, 2 * H))                     # (1, 2HF)
        wf2_big = jnp.zeros((2 * HF, 2 * HF), jnp.float32)
        for g in range(2 * H):
            wf2_big = wf2_big.at[g * F:(g + 1) * F, g * F:(g + 1) * F].set(wf2)
        bf2_big = jnp.tile(bf2, (1, 2 * H))

        # --- matmul-weight slab (compute_dtype): sections stacked on sublanes ---
        w_slab = jnp.zeros((R, LW), jnp.float32)
        for o, m in zip(row_off, (wqkv, wf1_big, wf2_big, wo, w1, w2)):
            w_slab = w_slab.at[o:o + m.shape[0], :m.shape[1]].set(m)
        w_slabs.append(w_slab.astype(compute_dtype))

        # --- f32 bias / LayerNorm slab: one row vector per parameter ------------
        rows = (bqkv, bf1_big, bf2_big, bo, b1, b2, g1, be1, g2, be2)
        b_slab = jnp.zeros((len(rows), LW), jnp.float32)
        for i, r in enumerate(rows):
            b_slab = b_slab.at[i:i + 1, :r.shape[1]].set(r)
        b_slabs.append(b_slab)

    return (jnp.stack(w_slabs, 0), jnp.stack(b_slabs, 0), tuple(row_off), R, LW)


def _default_compute_dtype():
    # bf16 MXU operands only pay off on v6e / v7x; v5e and older keep f32 operands.
    try:
        kind = jax.devices()[0].device_kind.lower()
    except Exception:
        return jnp.float32
    if "v6" in kind or "v7" in kind:
        return jnp.bfloat16
    return jnp.float32


def performer_encoder_pallas(src, layer_params, num_heads, num_features,
                             compute_dtype=None, num_batch_tiles=1):
    B, L, E = src.shape
    H = num_heads
    F = num_features
    Dh = E // H
    HF = H * F
    hidden = layer_params[0][12].shape[1]                    # w1: (E, hidden)
    n_layers = len(layer_params)
    if compute_dtype is None:
        compute_dtype = _default_compute_dtype()

    assert B % num_batch_tiles == 0
    Bt = B // num_batch_tiles                                # rows per batch tile

    w_slab, b_slab, row_off, R, LW = _prepare_params(
        layer_params, E, H, F, Dh, hidden, compute_dtype)
    mask = _head_mask(HF, E, F, Dh)
    n_brows = b_slab.shape[1]

    kernel = partial(_encoder_kernel, Bt=Bt, L=L, E=E, H=H, F=F, hidden=hidden,
                     n_layers=n_layers, row_off=row_off, compute_dtype=compute_dtype)

    # --- explicit VMEM budget: carry + double-buffered slabs + in/out blocks ----
    wsize = jnp.dtype(compute_dtype).itemsize
    act_bytes = Bt * L * max(E, 128) * 4
    vmem_bytes = (2 * (R * LW * wsize + _pad8(n_brows) * LW * 4)   # 2x buffered slabs
                  + 2 * 2 * act_bytes                              # in/out blocks
                  + act_bytes                                      # scratch carry
                  + HF * max(E, 128) * 4)                          # head mask
    vmem_limit = min(max(4 * vmem_bytes, 16 << 20), 48 << 20)

    flops = 2 * n_layers * B * L * (
        3 * E * E + 3 * E * 2 * HF + (2 * HF) ** 2 + 2 * HF * E
        + E * E + 2 * E * hidden)
    transcendentals = n_layers * B * L * (2 * 2 * HF + hidden + 2 * E)
    bytes_accessed = int(w_slab.size * wsize + b_slab.size * 4
                         + mask.size * 4 + 2 * B * L * E * 4)

    return pl.pallas_call(
        kernel,
        out_shape=jax.ShapeDtypeStruct((B, L, E), jnp.float32),
        grid=(num_batch_tiles, n_layers),
        in_specs=[
            pl.BlockSpec((Bt, L, E), lambda b, l: (b, 0, 0)),      # src: 1 DMA / tile
            pl.BlockSpec((HF, E), lambda b, l: (0, 0)),            # head mask: 1 DMA
            pl.BlockSpec((1, R, LW), lambda b, l: (l, 0, 0)),      # weight slab / layer
            pl.BlockSpec((1, n_brows, LW), lambda b, l: (l, 0, 0)),  # bias slab / layer
        ],
        out_specs=pl.BlockSpec((Bt, L, E), lambda b, l: (b, 0, 0)),
        scratch_shapes=[pltpu.VMEM((Bt * L, E), jnp.float32)],     # resident carry
        compiler_params=pltpu.CompilerParams(
            # batch tiles are independent (v7x megacore); the layer axis carries
            # state through the VMEM scratch -> sequential.
            dimension_semantics=("parallel", "arbitrary"),
            vmem_limit_bytes=vmem_limit),
        cost_estimate=pl.CostEstimate(flops=flops,
                                      transcendentals=transcendentals,
                                      bytes_accessed=bytes_accessed),
    )(src, mask, w_slab, b_slab)


# ---------------------------------------------------------------------------
# Deterministic parameter construction (PyTorch Linear: y = x @ W.T + b;
# here weights are stored pre-transposed as (in, out)).
# ---------------------------------------------------------------------------
def init_layer_params(key, embed_dim, num_heads, num_features, hidden_dim):
    head_dim = embed_dim // num_heads
    keys = jax.random.split(key, 8)

    def lin(k, fan_in, fan_out):
        w = 0.05 * jax.random.normal(k, (fan_in, fan_out), jnp.float32)
        b = 0.05 * jax.random.normal(jax.random.fold_in(k, 1), (1, fan_out),
                                     jnp.float32)
        return w, b

    wq, bq = lin(keys[0], embed_dim, embed_dim)
    wk, bk = lin(keys[1], embed_dim, embed_dim)
    wv, bv = lin(keys[2], embed_dim, embed_dim)
    wo, bo = lin(keys[3], embed_dim, embed_dim)
    wf1, bf1 = lin(keys[4], head_dim, num_features)
    wf2, bf2 = lin(keys[5], num_features, num_features)
    w1, b1 = lin(keys[6], embed_dim, hidden_dim)
    w2, b2 = lin(keys[7], hidden_dim, embed_dim)
    g1 = jnp.ones((1, embed_dim), jnp.float32)
    be1 = jnp.zeros((1, embed_dim), jnp.float32)
    g2 = jnp.ones((1, embed_dim), jnp.float32)
    be2 = jnp.zeros((1, embed_dim), jnp.float32)
    return (wq, bq, wk, bk, wv, bv, wo, bo,
            wf1, bf1, wf2, bf2,
            w1, b1, w2, b2,
            g1, be1, g2, be2)


# ---------------------------------------------------------------------------
# Pure-JAX reference (mirrors the PyTorch forward) for correctness check
# ---------------------------------------------------------------------------
def performer_layer_ref(src, params, num_heads):
    (wq, bq, wk, bk, wv, bv, wo, bo,
     wf1, bf1, wf2, bf2,
     w1, b1, w2, b2,
     g1, be1, g2, be2) = params
    B, L, E = src.shape
    Dh = E // num_heads

    def feat(z):
        h = jnp.maximum(z @ wf1 + bf1, 0.0)
        h = h @ wf2 + bf2
        return _softplus(h)

    def ln(z, g, b):
        mu = jnp.mean(z, axis=-1, keepdims=True)
        var = jnp.mean((z - mu) ** 2, axis=-1, keepdims=True)
        return (z - mu) / jnp.sqrt(var + 1e-5) * g + b

    Q = (src @ wq + bq).reshape(B, L, num_heads, Dh)
    K = (src @ wk + bk).reshape(B, L, num_heads, Dh)
    V = (src @ wv + bv).reshape(B, L, num_heads, Dh)
    Qf = feat(Q)
    Kf = feat(K)
    KV = jnp.einsum('blhd,blhe->bhde', Kf, V)
    QKV = jnp.einsum('blhd,bhde->blhe', Qf, KV).reshape(B, L, E)
    attn = QKV @ wo + bo
    x = ln(src + attn, g1, be1)
    ff = _gelu(x @ w1 + b1) @ w2 + b2
    return ln(x + ff, g2, be2)


# ---------------------------------------------------------------------------
if __name__ == "__main__":
    B, L, E = 2, 8, 32
    num_heads = 4
    hidden_dim = 64
    num_features = 16
    num_layers = 2

    key = jax.random.PRNGKey(0)
    k_src, k_par = jax.random.split(key)
    src = jax.random.normal(k_src, (B, L, E), jnp.float32)

    layer_params = [
        init_layer_params(jax.random.fold_in(k_par, i),
                          E, num_heads, num_features, hidden_dim)
        for i in range(num_layers)
    ]

    # Reference (plain JAX, f32)
    x_ref = src
    for p in layer_params:
        x_ref = performer_layer_ref(x_ref, p, num_heads)
    x_ref = jax.block_until_ready(x_ref)

    # Pallas encoder, f32 MXU operands — strict correctness check.
    out_f32 = jax.block_until_ready(
        performer_encoder_pallas(src, layer_params, num_heads, num_features,
                                 compute_dtype=jnp.float32))
    err_f32 = float(jnp.max(jnp.abs(out_f32 - x_ref)))
    assert err_f32 < 1e-4, f"f32 mismatch vs reference: {err_f32}"

    # Pallas encoder, bf16 MXU operands / f32 accumulation (v6e/v7x fast path) —
    # looser tolerance against the f32 reference.
    out_bf16 = jax.block_until_ready(
        performer_encoder_pallas(src, layer_params, num_heads, num_features,
                                 compute_dtype=jnp.bfloat16))
    err_bf16 = float(jnp.max(jnp.abs(out_bf16 - x_ref)))
    assert bool(jnp.all(jnp.isfinite(out_bf16))) and err_bf16 < 1e-1, \
        f"bf16 mismatch vs reference: {err_bf16}"

    print("KERNEL_OK")
</pallas_src>

<mosaic_0001>
module attributes {stable_mosaic.version = 11 : i64} {
  func.func @_encoder_kernel(%arg0: i32, %arg1: i32, %arg2: memref<2x8x32xf32, #tpu.memory_space<vmem>>, %arg3: memref<64x32xf32, #tpu.memory_space<vmem>>, %arg4: memref<1x384x128xf32, #tpu.memory_space<vmem>>, %arg5: memref<1x10x128xf32, #tpu.memory_space<vmem>>, %arg6: memref<2x8x32xf32, #tpu.memory_space<vmem>>, %arg7: memref<16x32xf32, #tpu.memory_space<vmem>>) attributes {dimension_semantics = [#tpu.dimension_semantics<parallel>, #tpu.dimension_semantics<arbitrary>], iteration_bounds = array<i64: 1, 2>, scalar_prefetch = 0 : i64, scratch_operands = 1 : i64, tpu.core_type = #tpu.core_type<tc>, window_params = [{transform_indices = @transform_0, window_bounds = array<i64: 2, 8, 32>}, {pipeline_mode = #tpu.pipeline_mode<synchronous>, transform_indices = @transform_1, window_bounds = array<i64: 64, 32>}, {transform_indices = @transform_2, window_bounds = array<i64: 1, 384, 128>}, {transform_indices = @transform_3, window_bounds = array<i64: 1, 10, 128>}, {transform_indices = @transform_4, window_bounds = array<i64: 2, 8, 32>}]} {
    %c0_i32 = arith.constant 0 : i32
    %0 = arith.cmpi eq, %arg1, %c0_i32 : i32
    %1 = arith.extui %0 : i1 to i32
    %c0_i32_0 = arith.constant 0 : i32
    %2 = arith.cmpi ne, %1, %c0_i32_0 : i32
    scf.if %2 {
      %c0_64 = arith.constant 0 : index
      %c0_65 = arith.constant 0 : index
      %c0_66 = arith.constant 0 : index
      %134 = vector.load %arg2[%c0_64, %c0_65, %c0_66] : memref<2x8x32xf32, #tpu.memory_space<vmem>>, vector<2x8x32xf32>
      %135 = vector.shape_cast %134 : vector<2x8x32xf32> to vector<16x32xf32>
      %c0_67 = arith.constant 0 : index
      %c0_68 = arith.constant 0 : index
      %136 = vector.load %arg7[%c0_67, %c0_68] : memref<16x32xf32, #tpu.memory_space<vmem>>, vector<16x32xf32>
      tpu.vector_store %arg7[%c0_67, %c0_68], %135 {strides = array<i32>} : memref<16x32xf32, #tpu.memory_space<vmem>>, vector<16x32xf32>,
    } else {
    }
    %c0 = arith.constant 0 : index
    %c0_1 = arith.constant 0 : index
    %3 = vector.load %arg7[%c0, %c0_1] : memref<16x32xf32, #tpu.memory_space<vmem>>, vector<16x32xf32>
    %c0_2 = arith.constant 0 : index
    %c0_3 = arith.constant 0 : index
    %c0_4 = arith.constant 0 : index
    %4 = vector.load %arg4[%c0_2, %c0_3, %c0_4] : memref<1x384x128xf32, #tpu.memory_space<vmem>>, vector<1x32x96xf32>
    %5 = vector.shape_cast %4 : vector<1x32x96xf32> to vector<32x96xf32>
    %cst = arith.constant dense<0.000000e+00> : vector<16x96xf32>
    %6 = tpu.matmul %3, %5, %cst {dimension_numbers = #tpu.dot_dimension_numbers<[1], [0], [0], [1], [0, 0, 1, 1], [], []>} : vector<16x32xf32>, vector<32x96xf32>, vector<16x96xf32> -> vector<16x96xf32>
    %c0_5 = arith.constant 0 : index
    %c0_6 = arith.constant 0 : index
    %c0_7 = arith.constant 0 : index
    %7 = vector.load %arg5[%c0_5, %c0_6, %c0_7] : memref<1x10x128xf32, #tpu.memory_space<vmem>>, vector<1x1x96xf32>
    %8 = vector.shape_cast %7 : vector<1x1x96xf32> to vector<1x96xf32>
    %9 = vector.broadcast %8 : vector<1x96xf32> to vector<16x96xf32>
    %10 = arith.addf %6, %9 : vector<16x96xf32>
    %11 = vector.extract_strided_slice %10 {offsets = [0, 64], sizes = [16, 32], strides = [1, 1]} : vector<16x96xf32> to vector<16x32xf32>
    %c0_8 = arith.constant 0 : index
    %c32 = arith.constant 32 : index
    %c0_9 = arith.constant 0 : index
    %12 = vector.load %arg4[%c0_8, %c32, %c0_9] : memref<1x384x128xf32, #tpu.memory_space<vmem>>, vector<1x96x128xf32>
    %13 = vector.shape_cast %12 : vector<1x96x128xf32> to vector<96x128xf32>
    %cst_10 = arith.constant dense<0.000000e+00> : vector<16x128xf32>
    %14 = tpu.matmul %10, %13, %cst_10 {dimension_numbers = #tpu.dot_dimension_numbers<[1], [0], [0], [1], [0, 0, 1, 1], [], []>} : vector<16x96xf32>, vector<96x128xf32>, vector<16x128xf32> -> vector<16x128xf32>
    %c0_11 = arith.constant 0 : index
    %c1 = arith.constant 1 : index
    %c0_12 = arith.constant 0 : index
    %15 = vector.load %arg5[%c0_11, %c1, %c0_12] : memref<1x10x128xf32, #tpu.memory_space<vmem>>, vector<1x1x128xf32>
    %16 = vector.shape_cast %15 : vector<1x1x128xf32> to vector<1x128xf32>
    %17 = vector.broadcast %16 : vector<1x128xf32> to vector<16x128xf32>
    %18 = arith.addf %14, %17 : vector<16x128xf32>
    %cst_13 = arith.constant 0.000000e+00 : f32
    %19 = vector.broadcast %cst_13 : f32 to vector<16x128xf32>
    %20 = arith.maximumf %18, %19 : vector<16x128xf32>
    %c0_14 = arith.constant 0 : index
    %c128 = arith.constant 128 : index
    %c0_15 = arith.constant 0 : index
    %21 = vector.load %arg4[%c0_14, %c128, %c0_15] : memref<1x384x128xf32, #tpu.memory_space<vmem>>, vector<1x128x128xf32>
    %22 = vector.shape_cast %21 : vector<1x128x128xf32> to vector<128x128xf32>
    %cst_16 = arith.constant dense<0.000000e+00> : vector<16x128xf32>
    %23 = tpu.matmul %20, %22, %cst_16 {dimension_numbers = #tpu.dot_dimension_numbers<[1], [0], [0], [1], [0, 0, 1, 1], [], []>} : vector<16x128xf32>, vector<128x128xf32>, vector<16x128xf32> -> vector<16x128xf32>
    %c0_17 = arith.constant 0 : index
    %c2 = arith.constant 2 : index
    %c0_18 = arith.constant 0 : index
    %24 = vector.load %arg5[%c0_17, %c2, %c0_18] : memref<1x10x128xf32, #tpu.memory_space<vmem>>, vector<1x1x128xf32>
    %25 = vector.shape_cast %24 : vector<1x1x128xf32> to vector<1x128xf32>
    %26 = vector.broadcast %25 : vector<1x128xf32> to vector<16x128xf32>
    %27 = arith.addf %23, %26 : vector<16x128xf32>
    %cst_19 = arith.constant 2.000000e+01 : f32
    %28 = vector.broadcast %cst_19 : f32 to vector<16x128xf32>
    %29 = arith.cmpf ogt, %27, %28 : vector<16x128xf32>
    %cst_20 = arith.constant 2.000000e+01 : f32
    %30 = vector.broadcast %cst_20 : f32 to vector<16x128xf32>
    %31 = arith.minimumf %27, %30 : vector<16x128xf32>
    %32 = math.exp %31 : vector<16x128xf32>
    %33 = math.log1p %32 : vector<16x128xf32>
    %34 = arith.select %29, %27, %33 : vector<16x128xi1>, vector<16x128xf32>
    %35 = vector.extract_strided_slice %34 {offsets = [0, 0], sizes = [16, 64], strides = [1, 1]} : vector<16x128xf32> to vector<16x64xf32>
    %36 = vector.shape_cast %35 : vector<16x64xf32> to vector<2x8x64xf32>
    %37 = vector.extract_strided_slice %34 {offsets = [0, 64], sizes = [16, 64], strides = [1, 1]} : vector<16x128xf32> to vector<16x64xf32>
    %38 = vector.shape_cast %37 : vector<16x64xf32> to vector<2x8x64xf32>
    %39 = vector.shape_cast %11 : vector<16x32xf32> to vector<2x8x32xf32>
    "tpu.trace_start"() <{level = 10 : i32, message = "blf,bld->bfd"}> : () -> ()
    %cst_21 = arith.constant dense<0.000000e+00> : vector<2x64x32xf32>
    %40 = tpu.matmul %38, %39, %cst_21 {dimension_numbers = #tpu.dot_dimension_numbers<[1], [1], [2], [2], [0, 0, 0, 2, 1, 2], [0], [0]>} : vector<2x8x64xf32>, vector<2x8x32xf32>, vector<2x64x32xf32> -> vector<2x64x32xf32>
    "tpu.trace_stop"() : () -> ()
    %c0_22 = arith.constant 0 : index
    %c0_23 = arith.constant 0 : index
    %41 = vector.load %arg3[%c0_22, %c0_23] : memref<64x32xf32, #tpu.memory_space<vmem>>, vector<64x32xf32>
    %42 = vector.shape_cast %41 : vector<64x32xf32> to vector<1x64x32xf32>
    %43 = vector.broadcast %42 : vector<1x64x32xf32> to vector<2x64x32xf32>
    %44 = arith.mulf %40, %43 : vector<2x64x32xf32>
    "tpu.trace_start"() <{level = 10 : i32, message = "blf,bfd->bld"}> : () -> ()
    %cst_24 = arith.constant dense<0.000000e+00> : vector<2x8x32xf32>
    %45 = tpu.matmul %36, %44, %cst_24 {dimension_numbers = #tpu.dot_dimension_numbers<[2], [1], [1], [2], [0, 0, 0, 1, 1, 2], [0], [0]>} : vector<2x8x64xf32>, vector<2x64x32xf32>, vector<2x8x32xf32> -> vector<2x8x32xf32>
    "tpu.trace_stop"() : () -> ()
    %46 = vector.shape_cast %45 : vector<2x8x32xf32> to vector<16x32xf32>
    %c0_25 = arith.constant 0 : index
    %c256 = arith.constant 256 : index
    %c0_26 = arith.constant 0 : index
    %47 = vector.load %arg4[%c0_25, %c256, %c0_26] : memref<1x384x128xf32, #tpu.memory_space<vmem>>, vector<1x32x32xf32>
    %48 = vector.shape_cast %47 : vector<1x32x32xf32> to vector<32x32xf32>
    %cst_27 = arith.constant dense<0.000000e+00> : vector<16x32xf32>
    %49 = tpu.matmul %46, %48, %cst_27 {dimension_numbers = #tpu.dot_dimension_numbers<[1], [0], [0], [1], [0, 0, 1, 1], [], []>} : vector<16x32xf32>, vector<32x32xf32>, vector<16x32xf32> -> vector<16x32xf32>
    %c0_28 = arith.constant 0 : index
    %c3 = arith.constant 3 : index
    %c0_29 = arith.constant 0 : index
    %50 = vector.load %arg5[%c0_28, %c3, %c0_29] : memref<1x10x128xf32, #tpu.memory_space<vmem>>, vector<1x1x32xf32>
    %51 = vector.shape_cast %50 : vector<1x1x32xf32> to vector<1x32xf32>
    %52 = vector.broadcast %51 : vector<1x32xf32> to vector<16x32xf32>
    %53 = arith.addf %49, %52 : vector<16x32xf32>
    %54 = arith.addf %3, %53 : vector<16x32xf32>
    %cst_30 = arith.constant dense<0.000000e+00> : vector<16xf32>
    %55 = vector.multi_reduction <add>, %54, %cst_30 [1] : vector<16x32xf32> to vector<16xf32>
    %56 = vector.shape_cast %55 : vector<16xf32> to vector<16x1xf32>
    %cst_31 = arith.constant 3.200000e+01 : f32
    %57 = vector.broadcast %cst_31 : f32 to vector<16x1xf32>
    %58 = arith.divf %56, %57 : vector<16x1xf32>
    %59 = vector.broadcast %58 : vector<16x1xf32> to vector<16x32xf32>
    %60 = arith.subf %54, %59 : vector<16x32xf32>
    %61 = arith.mulf %60, %60 : vector<16x32xf32>
    %cst_32 = arith.constant dense<0.000000e+00> : vector<16xf32>
    %62 = vector.multi_reduction <add>, %61, %cst_32 [1] : vector<16x32xf32> to vector<16xf32>
    %63 = vector.shape_cast %62 : vector<16xf32> to vector<16x1xf32>
    %cst_33 = arith.constant 3.200000e+01 : f32
    %64 = vector.broadcast %cst_33 : f32 to vector<16x1xf32>
    %65 = arith.divf %63, %64 : vector<16x1xf32>
    %66 = vector.broadcast %58 : vector<16x1xf32> to vector<16x32xf32>
    %67 = arith.subf %54, %66 : vector<16x32xf32>
    %cst_34 = arith.constant 9.99999974E-6 : f32
    %68 = vector.broadcast %cst_34 : f32 to vector<16x1xf32>
    %69 = arith.addf %65, %68 : vector<16x1xf32>
    %70 = math.rsqrt %69 : vector<16x1xf32>
    %71 = vector.broadcast %70 : vector<16x1xf32> to vector<16x32xf32>
    %72 = arith.mulf %67, %71 : vector<16x32xf32>
    %c0_35 = arith.constant 0 : index
    %c6 = arith.constant 6 : index
    %c0_36 = arith.constant 0 : index
    %73 = vector.load %arg5[%c0_35, %c6, %c0_36] : memref<1x10x128xf32, #tpu.memory_space<vmem>>, vector<1x1x32xf32>
    %74 = vector.shape_cast %73 : vector<1x1x32xf32> to vector<1x32xf32>
    %75 = vector.broadcast %74 : vector<1x32xf32> to vector<16x32xf32>
    %76 = arith.mulf %72, %75 : vector<16x32xf32>
    %c0_37 = arith.constant 0 : index
    %c7 = arith.constant 7 : index
    %c0_38 = arith.constant 0 : index
    %77 = vector.load %arg5[%c0_37, %c7, %c0_38] : memref<1x10x128xf32, #tpu.memory_space<vmem>>, vector<1x1x32xf32>
    %78 = vector.shape_cast %77 : vector<1x1x32xf32> to vector<1x32xf32>
    %79 = vector.broadcast %78 : vector<1x32xf32> to vector<16x32xf32>
    %80 = arith.addf %76, %79 : vector<16x32xf32>
    %c0_39 = arith.constant 0 : index
    %c288 = arith.constant 288 : index
    %c0_40 = arith.constant 0 : index
    %81 = vector.load %arg4[%c0_39, %c288, %c0_40] : memref<1x384x128xf32, #tpu.memory_space<vmem>>, vector<1x32x64xf32>
    %82 = vector.shape_cast %81 : vector<1x32x64xf32> to vector<32x64xf32>
    %cst_41 = arith.constant dense<0.000000e+00> : vector<16x64xf32>
    %83 = tpu.matmul %80, %82, %cst_41 {dimension_numbers = #tpu.dot_dimension_numbers<[1], [0], [0], [1], [0, 0, 1, 1], [], []>} : vector<16x32xf32>, vector<32x64xf32>, vector<16x64xf32> -> vector<16x64xf32>
    %c0_42 = arith.constant 0 : index
    %c4 = arith.constant 4 : index
    %c0_43 = arith.constant 0 : index
    %84 = vector.load %arg5[%c0_42, %c4, %c0_43] : memref<1x10x128xf32, #tpu.memory_space<vmem>>, vector<1x1x64xf32>
    %85 = vector.shape_cast %84 : vector<1x1x64xf32> to vector<1x64xf32>
    %86 = vector.broadcast %85 : vector<1x64xf32> to vector<16x64xf32>
    %87 = arith.addf %83, %86 : vector<16x64xf32>
    %cst_44 = arith.constant 5.000000e-01 : f32
    %88 = vector.broadcast %cst_44 : f32 to vector<16x64xf32>
    %89 = arith.mulf %88, %87 : vector<16x64xf32>
    %cst_45 = arith.constant 0.707106769 : f32
    %90 = vector.broadcast %cst_45 : f32 to vector<16x64xf32>
    %91 = arith.mulf %87, %90 : vector<16x64xf32>
    %92 = math.erf %91 : vector<16x64xf32>
    %cst_46 = arith.constant 1.000000e+00 : f32
    %93 = vector.broadcast %cst_46 : f32 to vector<16x64xf32>
    %94 = arith.addf %93, %92 : vector<16x64xf32>
    %95 = arith.mulf %89, %94 : vector<16x64xf32>
    %c0_47 = arith.constant 0 : index
    %c320 = arith.constant 320 : index
    %c0_48 = arith.constant 0 : index
    %96 = vector.load %arg4[%c0_47, %c320, %c0_48] : memref<1x384x128xf32, #tpu.memory_space<vmem>>, vector<1x64x32xf32>
    %97 = vector.shape_cast %96 : vector<1x64x32xf32> to vector<64x32xf32>
    %cst_49 = arith.constant dense<0.000000e+00> : vector<16x32xf32>
    %98 = tpu.matmul %95, %97, %cst_49 {dimension_numbers = #tpu.dot_dimension_numbers<[1], [0], [0], [1], [0, 0, 1, 1], [], []>} : vector<16x64xf32>, vector<64x32xf32>, vector<16x32xf32> -> vector<16x32xf32>
    %c0_50 = arith.constant 0 : index
    %c5 = arith.constant 5 : index
    %c0_51 = arith.constant 0 : index
    %99 = vector.load %arg5[%c0_50, %c5, %c0_51] : memref<1x10x128xf32, #tpu.memory_space<vmem>>, vector<1x1x32xf32>
    %100 = vector.shape_cast %99 : vector<1x1x32xf32> to vector<1x32xf32>
    %101 = vector.broadcast %100 : vector<1x32xf32> to vector<16x32xf32>
    %102 = arith.addf %98, %101 : vector<16x32xf32>
    %103 = arith.addf %80, %102 : vector<16x32xf32>
    %cst_52 = arith.constant dense<0.000000e+00> : vector<16xf32>
    %104 = vector.multi_reduction <add>, %103, %cst_52 [1] : vector<16x32xf32> to vector<16xf32>
    %105 = vector.shape_cast %104 : vector<16xf32> to vector<16x1xf32>
    %cst_53 = arith.constant 3.200000e+01 : f32
    %106 = vector.broadcast %cst_53 : f32 to vector<16x1xf32>
    %107 = arith.divf %105, %106 : vector<16x1xf32>
    %108 = vector.broadcast %107 : vector<16x1xf32> to vector<16x32xf32>
    %109 = arith.subf %103, %108 : vector<16x32xf32>
    %110 = arith.mulf %109, %109 : vector<16x32xf32>
    %cst_54 = arith.constant dense<0.000000e+00> : vector<16xf32>
    %111 = vector.multi_reduction <add>, %110, %cst_54 [1] : vector<16x32xf32> to vector<16xf32>
    %112 = vector.shape_cast %111 : vector<16xf32> to vector<16x1xf32>
    %cst_55 = arith.constant 3.200000e+01 : f32
    %113 = vector.broadcast %cst_55 : f32 to vector<16x1xf32>
    %114 = arith.divf %112, %113 : vector<16x1xf32>
    %115 = vector.broadcast %107 : vector<16x1xf32> to vector<16x32xf32>
    %116 = arith.subf %103, %115 : vector<16x32xf32>
    %cst_56 = arith.constant 9.99999974E-6 : f32
    %117 = vector.broadcast %cst_56 : f32 to vector<16x1xf32>
    %118 = arith.addf %114, %117 : vector<16x1xf32>
    %119 = math.rsqrt %118 : vector<16x1xf32>
    %120 = vector.broadcast %119 : vector<16x1xf32> to vector<16x32xf32>
    %121 = arith.mulf %116, %120 : vector<16x32xf32>
    %c0_57 = arith.constant 0 : index
    %c8 = arith.constant 8 : index
    %c0_58 = arith.constant 0 : index
    %122 = vector.load %arg5[%c0_57, %c8, %c0_58] : memref<1x10x128xf32, #tpu.memory_space<vmem>>, vector<1x1x32xf32>
    %123 = vector.shape_cast %122 : vector<1x1x32xf32> to vector<1x32xf32>
    %124 = vector.broadcast %123 : vector<1x32xf32> to vector<16x32xf32>
    %125 = arith.mulf %121, %124 : vector<16x32xf32>
    %c0_59 = arith.constant 0 : index
    %c9 = arith.constant 9 : index
    %c0_60 = arith.constant 0 : index
    %126 = vector.load %arg5[%c0_59, %c9, %c0_60] : memref<1x10x128xf32, #tpu.memory_space<vmem>>, vector<1x1x32xf32>
    %127 = vector.shape_cast %126 : vector<1x1x32xf32> to vector<1x32xf32>
    %128 = vector.broadcast %127 : vector<1x32xf32> to vector<16x32xf32>
    %129 = arith.addf %125, %128 : vector<16x32xf32>
    %c0_61 = arith.constant 0 : index
    %c0_62 = arith.constant 0 : index
    %130 = vector.load %arg7[%c0_61, %c0_62] : memref<16x32xf32, #tpu.memory_space<vmem>>, vector<16x32xf32>
    tpu.vector_store %arg7[%c0_61, %c0_62], %129 {strides = array<i32>} : memref<16x32xf32, #tpu.memory_space<vmem>>, vector<16x32xf32>,
    %c1_i32 = arith.constant 1 : i32
    %131 = arith.cmpi eq, %arg1, %c1_i32 : i32
    %132 = arith.extui %131 : i1 to i32
    %c0_i32_63 = arith.constant 0 : i32
    %133 = arith.cmpi ne, %132, %c0_i32_63 : i32
    scf.if %133 {
      %134 = vector.shape_cast %129 : vector<16x32xf32> to vector<2x8x32xf32>
      %c0_64 = arith.constant 0 : index
      %c0_65 = arith.constant 0 : index
      %c0_66 = arith.constant 0 : index
      %135 = vector.load %arg6[%c0_64, %c0_65, %c0_66] : memref<2x8x32xf32, #tpu.memory_space<vmem>>, vector<2x8x32xf32>
      tpu.vector_store %arg6[%c0_64, %c0_65, %c0_66], %134 {strides = array<i32>} : memref<2x8x32xf32, #tpu.memory_space<vmem>>, vector<2x8x32xf32>,
    } else {
    }
    return
  }
  func.func @transform_0(%arg0: i32, %arg1: i32) -> (i32, i32, i32) {
    %c0_i32 = arith.constant 0 : i32
    %c0_i32_0 = arith.constant 0 : i32
    %c0_i32_1 = arith.constant 0 : i32
    return %arg0, %c0_i32, %c0_i32_0 : i32, i32, i32
  }
  func.func @transform_1(%arg0: i32, %arg1: i32) -> (i32, i32) {
    %c0_i32 = arith.constant 0 : i32
    %c0_i32_0 = arith.constant 0 : i32
    %c0_i32_1 = arith.constant 0 : i32
    return %c0_i32, %c0_i32_0 : i32, i32
  }
  func.func @transform_2(%arg0: i32, %arg1: i32) -> (i32, i32, i32) {
    %c0_i32 = arith.constant 0 : i32
    %c0_i32_0 = arith.constant 0 : i32
    %c0_i32_1 = arith.constant 0 : i32
    return %arg1, %c0_i32, %c0_i32_0 : i32, i32, i32
  }
  func.func @transform_3(%arg0: i32, %arg1: i32) -> (i32, i32, i32) {
    %c0_i32 = arith.constant 0 : i32
    %c0_i32_0 = arith.constant 0 : i32
    %c0_i32_1 = arith.constant 0 : i32
    return %arg1, %c0_i32, %c0_i32_0 : i32, i32, i32
  }
  func.func @transform_4(%arg0: i32, %arg1: i32) -> (i32, i32, i32) {
    %c0_i32 = arith.constant 0 : i32
    %c0_i32_0 = arith.constant 0 : i32
    %c0_i32_1 = arith.constant 0 : i32
    return %arg0, %c0_i32, %c0_i32_0 : i32, i32, i32
  }
}

</mosaic_0001>

<llo_original>
// kernel: tpu_custom_call.1
$region0: #{tpu_custom_call.1}
  #allocation0 [shape = 'u32[]', space=smem, size = 0x4, offset = 0x4, fixed_abs, tag = 'smem constant byte address 0x4 - core index']
  #allocation1 [shape = 'u32[72,128]{1,0:T(1,128)}', space=vmem, size = 0x9000, scoped, tag = 'internal scratch']
  #allocation2 [shape = 'f32[16,32]{1,0:T(8,128)}', space=vmem, size = 0x2000, scoped, tag = 'scratch operand']
  %s0 = inlined_call_operand.vmem [shape: f32[2,8,32], index: 0, kind: input, shape index: {}]
  %s1 = inlined_call_operand.vmem [shape: f32[64,32], index: 1, kind: input, shape index: {}]
  %s2 = inlined_call_operand.hbm [shape: f32[2,384,128], index: 2, kind: input, shape index: {}]
  %s3 = inlined_call_operand.vmem [shape: f32[2,10,128], index: 3, kind: input, shape index: {}]
  %s4 = inlined_call_operand.hbm [shape: f32[2,8,32], index: 4, kind: output, shape index: {}]
  %s5 = sld [smem:[#allocation0]]
  $region61: #{tpu_custom_call.1} parent=0
    _
  %s7 = ssub.s32 1, %s5
  %s8 = scalar_select 0, %s7, %s5
  $region1: #{tpu_custom_call.1} parent=0
    #allocation3 [shape = 'u8[393216]{0}', space=vmem, size = 0x60000, scoped, tag = 'input window, operand 2']
    #allocation4 [shape = 's32[2]{0}', space=sflag, size = 0x8, scoped, tag = 'scoped memory for tpu_custom_call.1']
    #allocation5 [shape = 's32[2]{0}', space=sflag, size = 0x8, scoped, tag = 'scoped memory for tpu_custom_call.1']
    #allocation6 [shape = 'u8[8192]{0}', space=vmem, size = 0x2000, scoped, tag = 'output window, operand 0, single buffered']
    %9 = vsyncpa [#allocation4], 0
    %s10 = scalar_lea.sflag [#allocation4], 1
    %11 = vsyncpa %s10, 0
    %12 = vsyncpa [#allocation5], 0
    loop: start=0, step=1, limit=4
    $region2: #{tpu_custom_call.1} parent=1 // loop_pre_header
      _
    $region3: #{tpu_custom_call.1} parent=1 // loop_header
      %s14 = sphi 0, %s18
      %p15 = scmp.ge.s32.totalorder %s14, 4
      %s21 = sphi 0, %s33
      %s22 = sphi 0, %s29
      %s23 = sphi 0, %s21
      %s24 = sphi 0, %s22
      %s25 = sphi 0, %s23
      %s26 = sphi 0, %s24
      %s36 = sphi 0, %s38
      %s39 = sphi 0, %s36
      %s40 = sphi 0, %s39
      %s56 = sphi 0, %s40
      %s60 = sphi 0, %s60
      %s62 = sphi 0, %s60
      %s63 = sphi 0, %s62
      %s77 = sphi 0, %s63
      %s83 = sphi 0, %s85
      %s86 = sphi 0, %s83
      %s87 = sphi 0, %s86
      %s103 = sphi 0, %s87
      %s109 = sphi 0, %s111
      %s112 = sphi 0, %s109
      %s113 = sphi 0, %s112
      %s129 = sphi 0, %s113
      %s135 = sphi 0, %s137
      %s138 = sphi 0, %s135
      %s139 = sphi 0, %s138
      %s155 = sphi 0, %s139
    $region4: #{tpu_custom_call.1} parent=1 // loop_header_branch
      %17 = sbr.rel (%p15) target = $region8
    $region5: #{tpu_custom_call.1} parent=1 // loop_body
      %s19 = ssub.s32 %s14, 1
      %s20 = ssub.s32 %s14, 2
      %s27 = sadd.s32 1, %s22
      %p28 = scmp.ge.s32.totalorder %s27, 2
      %s29 = scalar_select %p28, 0, %s27
      %s30 = sadd.s32 1, %s21
      %s31 = scalar_select %p28, %s30, %s21
      %p32 = scmp.ge.s32.totalorder %s31, 1
      %s33 = scalar_select %p32, 0, %s31
      %s34 = ssub.s32 %s21, %s33
      %p35 = scmp.eq.s32.totalorder %s34, 0
      %s37 = sadd.s32 %s36, 1
      %s38 = scalar_select %p35, %s36, %s37
      %p41 = pneg %p35
      %p42 = scmp.eq.s32.totalorder %s14, 1
      %p43 = por %p41, %p42
      %p44 = scmp.ne.s32.totalorder %s36, %s39
      %p45 = scmp.eq.s32.totalorder %s14, 0
      %p46 = por %p44, %p45
      %p47 = scmp.ne.s32.totalorder %s36, %s39
      %p48 = scmp.eq.s32.totalorder %s19, 1
      %p49 = por %p47, %p48
      %p50 = scmp.ne.s32.totalorder %s39, %s40
      %p51 = scmp.eq.s32.totalorder %s19, 0
      %p52 = por %p50, %p51
      %p53 = scmp.ne.s32.totalorder %s39, %s40
      %p54 = scmp.eq.s32.totalorder %s20, 1
      %p55 = por %p53, %p54
      %p57 = scmp.ne.s32.totalorder %s40, %s56
      %p58 = scmp.eq.s32.totalorder %s20, 0
      %p59 = por %p57, %p58
      %s61 = sadd.s32 %s60, 1
      %p64 = scmp.eq.s32.totalorder %s14, 1
      %p65 = scmp.ne.s32.totalorder %s60, %s62
      %p66 = scmp.eq.s32.totalorder %s14, 0
      %p67 = por %p65, %p66
      %p68 = scmp.ne.s32.totalorder %s60, %s62
      %p69 = scmp.eq.s32.totalorder %s19, 1
      %p70 = por %p68, %p69
      %p71 = scmp.ne.s32.totalorder %s62, %s63
      %p72 = scmp.eq.s32.totalorder %s19, 0
      %p73 = por %p71, %p72
      %p74 = scmp.ne.s32.totalorder %s62, %s63
      %p75 = scmp.eq.s32.totalorder %s20, 1
      %p76 = por %p74, %p75
      %p78 = scmp.ne.s32.totalorder %s63, %s77
      %p79 = scmp.eq.s32.totalorder %s20, 0
      %p80 = por %p78, %p79
      %s81 = ssub.s32 %s22, %s29
      %p82 = scmp.eq.s32.totalorder %s81, 0
      %s84 = sadd.s32 %s83, 1
      %s85 = scalar_select %p82, %s83, %s84
      %p88 = pneg %p82
      %p89 = scmp.eq.s32.totalorder %s14, 1
      %p90 = por %p88, %p89
      %p91 = scmp.ne.s32.totalorder %s83, %s86
      %p92 = scmp.eq.s32.totalorder %s14, 0
      %p93 = por %p91, %p92
      %p94 = scmp.ne.s32.totalorder %s83, %s86
      %p95 = scmp.eq.s32.totalorder %s19, 1
      %p96 = por %p94, %p95
      %p97 = scmp.ne.s32.totalorder %s86, %s87
      %p98 = scmp.eq.s32.totalorder %s19, 0
      %p99 = por %p97, %p98
      %p100 = scmp.ne.s32.totalorder %s86, %s87
      %p101 = scmp.eq.s32.totalorder %s20, 1
      %p102 = por %p100, %p101
      %p104 = scmp.ne.s32.totalorder %s87, %s103
      %p105 = scmp.eq.s32.totalorder %s20, 0
      %p106 = por %p104, %p105
      %s107 = ssub.s32 %s22, %s29
      %p108 = scmp.eq.s32.totalorder %s107, 0
      %s110 = sadd.s32 %s109, 1
      %s111 = scalar_select %p108, %s109, %s110
      %p114 = pneg %p108
      %p115 = scmp.eq.s32.totalorder %s14, 1
      %p116 = por %p114, %p115
      %p117 = scmp.ne.s32.totalorder %s109, %s112
      %p118 = scmp.eq.s32.totalorder %s14, 0
      %p119 = por %p117, %p118
      %p120 = scmp.ne.s32.totalorder %s109, %s112
      %p121 = scmp.eq.s32.totalorder %s19, 1
      %p122 = por %p120, %p121
      %p123 = scmp.ne.s32.totalorder %s112, %s113
      %p124 = scmp.eq.s32.totalorder %s19, 0
      %p125 = por %p123, %p124
      %p126 = scmp.ne.s32.totalorder %s112, %s113
      %p127 = scmp.eq.s32.totalorder %s20, 1
      %p128 = por %p126, %p127
      %p130 = scmp.ne.s32.totalorder %s113, %s129
      %p131 = scmp.eq.s32.totalorder %s20, 0
      %p132 = por %p130, %p131
      %s133 = ssub.s32 %s21, %s33
      %p134 = scmp.eq.s32.totalorder %s133, 0
      %s136 = sadd.s32 %s135, 1
      %s137 = scalar_select %p134, %s135, %s136
      %p140 = pneg %p134
      %p141 = scmp.eq.s32.totalorder %s14, 1
      %p142 = por %p140, %p141
      %p143 = scmp.ne.s32.totalorder %s135, %s138
      %p144 = scmp.eq.s32.totalorder %s14, 0
      %p145 = por %p143, %p144
      %p146 = scmp.ne.s32.totalorder %s135, %s138
      %p147 = scmp.eq.s32.totalorder %s19, 1
      %p148 = por %p146, %p147
      %p149 = scmp.ne.s32.totalorder %s138, %s139
      %p150 = scmp.eq.s32.totalorder %s19, 0
      %p151 = por %p149, %p150
      %p152 = scmp.ne.s32.totalorder %s138, %s139
      %p153 = scmp.eq.s32.totalorder %s20, 1
      %p154 = por %p152, %p153
      %p156 = scmp.ne.s32.totalorder %s139, %s155
      %p157 = scmp.eq.s32.totalorder %s20, 0
      %p158 = por %p156, %p157
      %p159 = scmp.le.s32.totalorder 1, %s14
      %p160 = scmp.lt.s32.totalorder %s14, 3
      %p161 = pnand %p159, %p160
      %p162 = pneg %p161
      // Predicated region
      $region9: #{tpu_custom_call.1} parent=5 // pred_check
        _
      $region10: #{tpu_custom_call.1} parent=5 // pred_check_branch
        %164 = sbr.rel (%p161) target = $region12
      $region11: #{tpu_custom_call.1} parent=5 // pred_region
        %s165 = ssub.s32 %s14, 1
        // Predicated region
        $region13: #{tpu_custom_call.1} parent=11 // pred_check
          %p166 = pneg %p52
        $region14: #{tpu_custom_call.1} parent=11 // pred_check_branch
          %168 = sbr.rel (%p166) target = $region16
        $region15: #{tpu_custom_call.1} parent=11 // pred_region
          %s169 = smul.u32 2, %s23
          %p170 = scmp.lt.s32.totalorder %s169, 1
          %s171 = scalar_select %p170, %s169, 1
          %s172 = smul.addr %s171, 8
          %s173 = scalar_lea.vmem %s0, %s172
          %s174 = smul.u32 2, %s23
        $region16: #{tpu_custom_call.1} parent=11 // pred_fallthru
          _
        // Predicated region
        $region17: #{tpu_custom_call.1} parent=11 // pred_check
          %p175 = pneg %p73
        $region18: #{tpu_custom_call.1} parent=11 // pred_check_branch
          %177 = sbr.rel (%p175) target = $region20
        $region19: #{tpu_custom_call.1} parent=11 // pred_region
          _
        $region20: #{tpu_custom_call.1} parent=11 // pred_fallthru
          _
      $region12: #{tpu_custom_call.1} parent=5 // pred_fallthru
        _
      %p178 = scmp.lt.s32.totalorder %s14, 2
      // Predicated region
      $region21: #{tpu_custom_call.1} parent=5 // pred_check
        %p179 = pneg %p178
      $region22: #{tpu_custom_call.1} parent=5 // pred_check_branch
        %181 = sbr.rel (%p179) target = $region24
      $region23: #{tpu_custom_call.1} parent=5 // pred_region
        // Predicated region
        $region25: #{tpu_custom_call.1} parent=23 // pred_check
          %p182 = pneg %p93
        $region26: #{tpu_custom_call.1} parent=23 // pred_check_branch
          %184 = sbr.rel (%p182) target = $region28
        $region27: #{tpu_custom_call.1} parent=23 // pred_region
          %s185 = sand.u32 %s83, 1
          %s186 = scalar_lea.sflag [#allocation4], %s185
          %s187 = sand.u32 %s83, 1
          %s188 = smul.addr %s187, 384
          %s189 = scalar_lea.vmem [#allocation3], %s188
          %191 = vsyncadd %s186, 0
          %s192 = smul.addr %s22, 48
          %s193 = smul.addr %s192, 8
          %s194 = scalar_lea.hbm %s2, %s193
          %s195 = sshll.u32 %s194, 4
          %s196 = int_to_ptr.hbm [resolvable:$true] %s195
          %s197 = sshll.u32 %s189, 4
          %s198 = int_to_ptr.vmem [resolvable:$true] %s197
          %203 = dma.hbm_to_vmem [thread:$0]  %s196, 6144, %s198, %s186, 128, 128, 8
        $region28: #{tpu_custom_call.1} parent=23 // pred_fallthru
          _
        // Predicated region
        $region29: #{tpu_custom_call.1} parent=23 // pred_check
          %p204 = pneg %p119
        $region30: #{tpu_custom_call.1} parent=23 // pred_check_branch
          %206 = sbr.rel (%p204) target = $region32
        $region31: #{tpu_custom_call.1} parent=23 // pred_region
          %p207 = scmp.lt.s32.totalorder %s22, 1
          %s208 = scalar_select %p207, %s22, 1
          %s209 = smul.addr %s208, 2
          %s210 = smul.addr %s209, 8
          %s211 = scalar_lea.vmem %s3, %s210
        $region32: #{tpu_custom_call.1} parent=23 // pred_fallthru
          _
      $region24: #{tpu_custom_call.1} parent=5 // pred_fallthru
        _
      %p212 = scmp.le.s32.totalorder 1, %s14
      %p213 = scmp.lt.s32.totalorder %s14, 3
      %p214 = pnand %p212, %p213
      %p215 = pneg %p214
      // Predicated region
      $region33: #{tpu_custom_call.1} parent=5 // pred_check
        _
      $region34: #{tpu_custom_call.1} parent=5 // pred_check_branch
        %217 = sbr.rel (%p214) target = $region36
      $region35: #{tpu_custom_call.1} parent=5 // pred_region
        %s218 = ssub.s32 %s14, 1
        %s219 = sand.u32 %s86, 1
        %s220 = scalar_lea.sflag [#allocation4], %s219
        %s221 = sand.u32 %s86, 1
        %s222 = smul.addr %s221, 384
        %s223 = scalar_lea.vmem [#allocation3], %s222
        // Predicated region
        $region37: #{tpu_custom_call.1} parent=35 // pred_check
          %p224 = pneg %p99
        $region38: #{tpu_custom_call.1} parent=35 // pred_check_branch
          %226 = sbr.rel (%p224) target = $region40
        $region39: #{tpu_custom_call.1} parent=35 // pred_region
          %228 = dma.done %s220, 6144
        $region40: #{tpu_custom_call.1} parent=35 // pred_fallthru
          _
        %s229 = smul.u32 2, %s23
        %p230 = scmp.lt.s32.totalorder %s229, 1
        %s231 = scalar_select %p230, %s229, 1
        %s232 = smul.addr %s231, 8
        %s233 = scalar_lea.vmem %s0, %s232
        %p234 = pneg %p52
        %p235 = pneg %p49
        %p236 = pneg %p73
        %p237 = pneg %p70
        %s238 = sand.u32 %s86, 1
        %s239 = scalar_lea.sflag [#allocation4], %s238
        %s240 = sand.u32 %s86, 1
        %s241 = smul.addr %s240, 384
        %s242 = scalar_lea.vmem [#allocation3], %s241
        %p243 = pneg %p99
        %p244 = pneg %p96
        %p245 = scmp.lt.s32.totalorder %s24, 1
        %s246 = scalar_select %p245, %s24, 1
        %s247 = smul.addr %s246, 2
        %s248 = smul.addr %s247, 8
        %s249 = scalar_lea.vmem %s3, %s248
        %p250 = pneg %p125
        %p251 = pneg %p122
        %p252 = pneg %p151
        %p253 = pneg %p148
        %s254 = smul.u32 2, %s23
        %p255 = scmp.lt.s32.totalorder %s254, 1
        %s256 = scalar_select %p255, %s254, 1
        %s257 = smul.addr %s256, 8
        %s258 = scalar_lea.vmem %s0, %s257
        %s259 = smul.u32 2, %s23
        %p260 = scmp.lt.s32.totalorder %s24, 1
        %s261 = scalar_select %p260, %s24, 1
        %s262 = smul.addr %s261, 2
        %s263 = smul.addr %s262, 8
        %s264 = scalar_lea.vmem %s3, %s263
        %s265 = smul.u32 2, %s23
        %p266 = scmp.eq.s32.totalorder %s24, 0
        // Predicated region
        $region41: #{tpu_custom_call.1} parent=35 // pred_check
          %p267 = pneg %p266
        $region42: #{tpu_custom_call.1} parent=35 // pred_check_branch
          %269 = sbr.rel (%p267) target = $region44
        $region43: #{tpu_custom_call.1} parent=35 // pred_region
          %v270 = vld [vmem:[%s258] sm:$0xff]
          %v271 = vld [vmem:[%s258 + $0x8] sm:$0xff]
          %vm272 = vcmask 261120
          %273 = vst.msk [vmem:[#allocation2] sm:$0xff] %vm272, %v270
          %274 = vst.msk [vmem:[#allocation2 + $0x8] sm:$0xff] %vm272, %v271
        $region44: #{tpu_custom_call.1} parent=35 // pred_fallthru
          _
        %v275 = vld [vmem:[#allocation2] sm:$0xff]
        %v276 = vld [vmem:[#allocation2 + $0x8] sm:$0xff]
        %v277 = vld [vmem:[%s223] sm:$0xff]
        %v278 = vld [vmem:[%s223 + $0x8] sm:$0xff]
        %v279 = vld [vmem:[%s223 + $0x10] sm:$0xff]
        %v280 = vld [vmem:[%s223 + $0x18] sm:$0xff]
        %v281 = vld [vmem:[%s264] sm:$0x1]
        %v282 = vperm.slane %v281, 0
        %vm283 = vcmask 261120
        %v285 = vsel %vm283, %v275, 0
        %v288 = vsel %vm283, %v276, 0
        %290 = vmatpush.msra.mxu0 0.0
        %291 = vmatpush.msra.mxu0 0.0
        %292 = vmatpush.msra.mxu0 0.0
        %293 = vmatpush.msra.mxu0 0.0
        %294 = vmatpush.msra.mxu0 0.0
        %295 = vmatpush.msra.mxu0 0.0
        %296 = vmatpush.msra.mxu0 0.0
        %297 = vmatpush.msra.mxu0 0.0
        %298 = vmatpush.msra.mxu0 0.0
        %299 = vmatpush.msra.mxu0 0.0
        %300 = vmatpush.msra.mxu0 0.0
        %301 = vmatpush.msra.mxu0 0.0
        %302 = vmatpush.msra.mxu0 %v280
        %303 = vmatpush.msra.mxu0 %v279
        %304 = vmatpush.msra.mxu0 %v278
        %305 = vmatpush.msra.mxu0 %v277
        %306 = vmatmul.f32.gmra.mxu0 %v285
        %v307 = vpop.f32.mrf.mxu0
        %v308 = vadd.f32 %v282, %v307
        %309 = vmatmul.f32.gmra.mxu0 %v288
        %v310 = vpop.f32.mrf.mxu0
        %v311 = vadd.f32 %v282, %v310
        %312 = vdwg.mxu0
        %v313 = vld [vmem:[%s223 + $0x20] sm:$0xff]
        %v314 = vld [vmem:[%s223 + $0x28] sm:$0xff]
        %v315 = vld [vmem:[%s223 + $0x30] sm:$0xff]
        %v316 = vld [vmem:[%s223 + $0x38] sm:$0xff]
        %v317 = vld [vmem:[%s223 + $0x40] sm:$0xff]
        %v318 = vld [vmem:[%s223 + $0x48] sm:$0xff]
        %v319 = vld [vmem:[%s223 + $0x50] sm:$0xff]
        %v320 = vld [vmem:[%s223 + $0x58] sm:$0xff]
        %v321 = vld [vmem:[%s223 + $0x60] sm:$0xff]
        %v322 = vld [vmem:[%s223 + $0x68] sm:$0xff]
        %v323 = vld [vmem:[%s223 + $0x70] sm:$0xff]
        %v324 = vld [vmem:[%s223 + $0x78] sm:$0xff]
        %v325 = vld [vmem:[%s264 + $0x1] sm:$0x1]
        %v326 = vperm.slane %v325, 0
        %vm327 = vcmask 785408
        %v329 = vsel %vm327, %v308, 0
        %v332 = vsel %vm327, %v311, 0
        %334 = vmatpush.msra.mxu0 0.0
        %335 = vmatpush.msra.mxu0 0.0
        %336 = vmatpush.msra.mxu0 0.0
        %337 = vmatpush.msra.mxu0 0.0
        %338 = vmatpush.msra.mxu0 %v324
        %339 = vmatpush.msra.mxu0 %v323
        %340 = vmatpush.msra.mxu0 %v322
        %341 = vmatpush.msra.mxu0 %v321
        %342 = vmatpush.msra.mxu0 %v320
        %343 = vmatpush.msra.mxu0 %v319
        %344 = vmatpush.msra.mxu0 %v318
        %345 = vmatpush.msra.mxu0 %v317
        %346 = vmatpush.msra.mxu0 %v316
        %347 = vmatpush.msra.mxu0 %v315
        %348 = vmatpush.msra.mxu0 %v314
        %349 = vmatpush.msra.mxu0 %v313
        %350 = vmatmul.f32.gmra.mxu0 %v329
        %v351 = vpop.f32.mrf.mxu0
        %v352 = vadd.f32 %v326, %v351
        %353 = vmatmul.f32.gmra.mxu0 %v332
        %v354 = vpop.f32.mrf.mxu0
        %v355 = vadd.f32 %v326, %v354
        %356 = vdwg.mxu0
        %v357 = vmax.f32 %v352, 0.0
        %v358 = vmax.f32 %v355, 0.0
        %v359 = vld [vmem:[%s223 + $0x80] sm:$0xff]
        %v360 = vld [vmem:[%s223 + $0x88] sm:$0xff]
        %v361 = vld [vmem:[%s223 + $0x90] sm:$0xff]
        %v362 = vld [vmem:[%s223 + $0x98] sm:$0xff]
        %v363 = vld [vmem:[%s223 + $0xa0] sm:$0xff]
        %v364 = vld [vmem:[%s223 + $0xa8] sm:$0xff]
        %v365 = vld [vmem:[%s223 + $0xb0] sm:$0xff]
        %v366 = vld [vmem:[%s223 + $0xb8] sm:$0xff]
        %v367 = vld [vmem:[%s223 + $0xc0] sm:$0xff]
        %v368 = vld [vmem:[%s223 + $0xc8] sm:$0xff]
        %v369 = vld [vmem:[%s223 + $0xd0] sm:$0xff]
        %v370 = vld [vmem:[%s223 + $0xd8] sm:$0xff]
        %v371 = vld [vmem:[%s223 + $0xe0] sm:$0xff]
        %v372 = vld [vmem:[%s223 + $0xe8] sm:$0xff]
        %v373 = vld [vmem:[%s223 + $0xf0] sm:$0xff]
        %v374 = vld [vmem:[%s223 + $0xf8] sm:$0xff]
        %v375 = vld [vmem:[%s264 + $0x2] sm:$0x1]
        %v376 = vperm.slane %v375, 0
        %377 = vmatpush.msra.mxu0 %v374
        %378 = vmatpush.msra.mxu0 %v373
        %379 = vmatpush.msra.mxu0 %v372
        %380 = vmatpush.msra.mxu0 %v371
        %381 = vmatpush.msra.mxu0 %v370
        %382 = vmatpush.msra.mxu0 %v369
        %383 = vmatpush.msra.mxu0 %v368
        %384 = vmatpush.msra.mxu0 %v367
        %385 = vmatpush.msra.mxu0 %v366
        %386 = vmatpush.msra.mxu0 %v365
        %387 = vmatpush.msra.mxu0 %v364
        %388 = vmatpush.msra.mxu0 %v363
        %389 = vmatpush.msra.mxu0 %v362
        %390 = vmatpush.msra.mxu0 %v361
        %391 = vmatpush.msra.mxu0 %v360
        %392 = vmatpush.msra.mxu0 %v359
        %393 = vmatmul.f32.gmra.mxu0 %v357
        %v394 = vpop.f32.mrf.mxu0
        %v395 = vadd.f32 %v376, %v394
        %396 = vmatmul.f32.gmra.mxu0 %v358
        %v397 = vpop.f32.mrf.mxu0
        %v398 = vadd.f32 %v376, %v397
        %399 = vdwg.mxu0
        %vm400 = vcmp.gt.f32.partialorder %v395, 20.0
        %vm401 = vcmp.gt.f32.partialorder %v398, 20.0
        %v402 = vmin.f32 %v395, 20.0
        %v403 = vmin.f32 %v398, 20.0
        %v404 = vmul.f32 %v402, 1.442695
        %v405 = vpow.pop %v404
        %v406 = vmul.f32 %v403, 1.442695
        %v407 = vpow.pop %v406
        %v408 = vadd.f32 %v405, 1.0
        %v409 = vlog2.pop %v408
        %v410 = vmul.f32 %v409, 0.6931472
        %v411 = vmul.f32 -0.5, %v405
        %v412 = vadd.f32 %v411, 1.0
        %v413 = vmul.f32 %v412, %v405
        %v414 = vand.u32 2147483647, %v405
        %vm415 = vcmp.lt.f32.partialorder %v414, 0.0004427343
        %v416 = vsel %vm415, %v413, %v410
        %v417 = vadd.f32 %v407, 1.0
        %v418 = vlog2.pop %v417
        %v419 = vmul.f32 %v418, 0.6931472
        %v420 = vmul.f32 -0.5, %v407
        %v421 = vadd.f32 %v420, 1.0
        %v422 = vmul.f32 %v421, %v407
        %v423 = vand.u32 2147483647, %v407
        %vm424 = vcmp.lt.f32.partialorder %v423, 0.0004427343
        %v425 = vsel %vm424, %v422, %v419
        %v426 = vsel %vm400, %v395, %v416
        %v427 = vsel %vm401, %v398, %v425
        %429 = vrot.lane.b32.xlu0 %v426, 64
        %v430 = vpop.permute.xlu0 %429
        %432 = vxpose.xlu0.b32.start [1/16] %v430, 128
        %433 = vxpose.xlu0.b32.cont [2/16] 0.0, 128
        %434 = vxpose.xlu0.b32.cont [3/16] 0.0, 128
        %435 = vxpose.xlu0.b32.cont [4/16] 0.0, 128
        %436 = vxpose.xlu0.b32.cont [5/16] 0.0, 128
        %437 = vxpose.xlu0.b32.cont [6/16] 0.0, 128
        %438 = vxpose.xlu0.b32.cont [7/16] 0.0, 128
        %439 = vxpose.xlu0.b32.cont [8/16] 0.0, 128
        %440 = vxpose.xlu0.b32.cont [9/16] 0.0, 128
        %441 = vxpose.xlu0.b32.cont [10/16] 0.0, 128
        %442 = vxpose.xlu0.b32.cont [11/16] 0.0, 128
        %443 = vxpose.xlu0.b32.cont [12/16] 0.0, 128
        %444 = vxpose.xlu0.b32.cont [13/16] 0.0, 128
        %445 = vxpose.xlu0.b32.cont [14/16] 0.0, 128
        %446 = vxpose.xlu0.b32.cont [15/16] 0.0, 128
        %447 = vxpose.xlu0.b32.end [16/16] 0.0, 128
        %v448 = vpop.trf.xlu0
        %v449 = vpop.trf.xlu0
        %v450 = vpop.trf.xlu0
        %v451 = vpop.trf.xlu0
        %v452 = vpop.trf.xlu0
        %v453 = vpop.trf.xlu0
        %v454 = vpop.trf.xlu0
        %v455 = vpop.trf.xlu0
        %v456 = vpop.trf.xlu0
        %v457 = vpop.trf.xlu0
        %v458 = vpop.trf.xlu0
        %v459 = vpop.trf.xlu0
        %v460 = vpop.trf.xlu0
        %v461 = vpop.trf.xlu0
        %v462 = vpop.trf.xlu0
        %v463 = vpop.trf.xlu0
        %464 = vrot.lane.b32.xlu0 %v308, 64
        %v465 = vpop.permute.xlu0 %464
        %vm467 = vcmask 64512
        %v469 = vsel %vm467, %v448, 0
        %v472 = vsel %vm467, %v449, 0
        %v475 = vsel %vm467, %v450, 0
        %v478 = vsel %vm467, %v451, 0
        %v481 = vsel %vm467, %v452, 0
        %v484 = vsel %vm467, %v453, 0
        %v487 = vsel %vm467, %v454, 0
        %v490 = vsel %vm467, %v455, 0
        %492 = vmatpush.msra.mxu0 0.0
        %493 = vmatpush.msra.mxu0 0.0
        %494 = vmatpush.msra.mxu0 0.0
        %495 = vmatpush.msra.mxu0 0.0
        %496 = vmatpush.msra.mxu0 0.0
        %497 = vmatpush.msra.mxu0 0.0
        %498 = vmatpush.msra.mxu0 0.0
        %499 = vmatpush.msra.mxu0 0.0
        %500 = vmatpush.msra.mxu0 0.0
        %501 = vmatpush.msra.mxu0 0.0
        %502 = vmatpush.msra.mxu0 0.0
        %503 = vmatpush.msra.mxu0 0.0
        %504 = vmatpush.msra.mxu0 0.0
        %505 = vmatpush.msra.mxu0 0.0
        %506 = vmatpush.msra.mxu0 0.0
        %507 = vmatpush.msra.mxu0 %v465
        %508 = vmatmul.f32.gmra.mxu0 %v469
        %v509 = vpop.f32.mrf.mxu0
        %v510 = vadd.f32 0.0, %v509
        %511 = vmatmul.f32.gmra.mxu0 %v472
        %v512 = vpop.f32.mrf.mxu0
        %v513 = vadd.f32 0.0, %v512
        %514 = vmatmul.f32.gmra.mxu0 %v475
        %v515 = vpop.f32.mrf.mxu0
        %v516 = vadd.f32 0.0, %v515
        %517 = vmatmul.f32.gmra.mxu0 %v478
        %v518 = vpop.f32.mrf.mxu0
        %v519 = vadd.f32 0.0, %v518
        %520 = vmatmul.f32.gmra.mxu0 %v481
        %v521 = vpop.f32.mrf.mxu0
        %v522 = vadd.f32 0.0, %v521
        %523 = vmatmul.f32.gmra.mxu0 %v484
        %v524 = vpop.f32.mrf.mxu0
        %v525 = vadd.f32 0.0, %v524
        %526 = vmatmul.f32.gmra.mxu0 %v487
        %v527 = vpop.f32.mrf.mxu0
        %v528 = vadd.f32 0.0, %v527
        %529 = vmatmul.f32.gmra.mxu0 %v490
        %v530 = vpop.f32.mrf.mxu0
        %v531 = vadd.f32 0.0, %v530
        %532 = vdwg.mxu0
        %534 = vrot.lane.b32.xlu0 %v427, 64
        %v535 = vpop.permute.xlu0 %534
        %537 = vxpose.xlu0.b32.start [1/16] %v535, 128
        %538 = vxpose.xlu0.b32.cont [2/16] 0.0, 128
        %539 = vxpose.xlu0.b32.cont [3/16] 0.0, 128
        %540 = vxpose.xlu0.b32.cont [4/16] 0.0, 128
        %541 = vxpose.xlu0.b32.cont [5/16] 0.0, 128
        %542 = vxpose.xlu0.b32.cont [6/16] 0.0, 128
        %543 = vxpose.xlu0.b32.cont [7/16] 0.0, 128
        %544 = vxpose.xlu0.b32.cont [8/16] 0.0, 128
        %545 = vxpose.xlu0.b32.cont [9/16] 0.0, 128
        %546 = vxpose.xlu0.b32.cont [10/16] 0.0, 128
        %547 = vxpose.xlu0.b32.cont [11/16] 0.0, 128
        %548 = vxpose.xlu0.b32.cont [12/16] 0.0, 128
        %549 = vxpose.xlu0.b32.cont [13/16] 0.0, 128
        %550 = vxpose.xlu0.b32.cont [14/16] 0.0, 128
        %551 = vxpose.xlu0.b32.cont [15/16] 0.0, 128
        %552 = vxpose.xlu0.b32.end [16/16] 0.0, 128
        %v553 = vpop.trf.xlu0
        %v554 = vpop.trf.xlu0
        %v555 = vpop.trf.xlu0
        %v556 = vpop.trf.xlu0
        %v557 = vpop.trf.xlu0
        %v558 = vpop.trf.xlu0
        %v559 = vpop.trf.xlu0
        %v560 = vpop.trf.xlu0
        %v561 = vpop.trf.xlu0
        %v562 = vpop.trf.xlu0
        %v563 = vpop.trf.xlu0
        %v564 = vpop.trf.xlu0
        %v565 = vpop.trf.xlu0
        %v566 = vpop.trf.xlu0
        %v567 = vpop.trf.xlu0
        %v568 = vpop.trf.xlu0
        %569 = vrot.lane.b32.xlu0 %v311, 64
        %v570 = vpop.permute.xlu0 %569
        %v573 = vsel %vm467, %v553, 0
        %v576 = vsel %vm467, %v554, 0
        %v579 = vsel %vm467, %v555, 0
        %v582 = vsel %vm467, %v556, 0
        %v585 = vsel %vm467, %v557, 0
        %v588 = vsel %vm467, %v558, 0
        %v591 = vsel %vm467, %v559, 0
        %v594 = vsel %vm467, %v560, 0
        %596 = vmatpush.msra.mxu0 0.0
        %597 = vmatpush.msra.mxu0 0.0
        %598 = vmatpush.msra.mxu0 0.0
        %599 = vmatpush.msra.mxu0 0.0
        %600 = vmatpush.msra.mxu0 0.0
        %601 = vmatpush.msra.mxu0 0.0
        %602 = vmatpush.msra.mxu0 0.0
        %603 = vmatpush.msra.mxu0 0.0
        %604 = vmatpush.msra.mxu0 0.0
        %605 = vmatpush.msra.mxu0 0.0
        %606 = vmatpush.msra.mxu0 0.0
        %607 = vmatpush.msra.mxu0 0.0
        %608 = vmatpush.msra.mxu0 0.0
        %609 = vmatpush.msra.mxu0 0.0
        %610 = vmatpush.msra.mxu0 0.0
        %611 = vmatpush.msra.mxu0 %v570
        %612 = vmatmul.f32.gmra.mxu0 %v573
        %v613 = vpop.f32.mrf.mxu0
        %v614 = vadd.f32 0.0, %v613
        %615 = vmatmul.f32.gmra.mxu0 %v576
        %v616 = vpop.f32.mrf.mxu0
        %v617 = vadd.f32 0.0, %v616
        %618 = vmatmul.f32.gmra.mxu0 %v579
        %v619 = vpop.f32.mrf.mxu0
        %v620 = vadd.f32 0.0, %v619
        %621 = vmatmul.f32.gmra.mxu0 %v582
        %v622 = vpop.f32.mrf.mxu0
        %v623 = vadd.f32 0.0, %v622
        %624 = vmatmul.f32.gmra.mxu0 %v585
        %v625 = vpop.f32.mrf.mxu0
        %v626 = vadd.f32 0.0, %v625
        %627 = vmatmul.f32.gmra.mxu0 %v588
        %v628 = vpop.f32.mrf.mxu0
        %v629 = vadd.f32 0.0, %v628
        %630 = vmatmul.f32.gmra.mxu0 %v591
        %v631 = vpop.f32.mrf.mxu0
        %v632 = vadd.f32 0.0, %v631
        %633 = vmatmul.f32.gmra.mxu0 %v594
        %v634 = vpop.f32.mrf.mxu0
        %v635 = vadd.f32 0.0, %v634
        %636 = vdwg.mxu0
        %v637 = vld [vmem:[%s1] sm:$0xff]
        %v638 = vld [vmem:[%s1 + $0x8] sm:$0xff]
        %v639 = vld [vmem:[%s1 + $0x10] sm:$0xff]
        %v640 = vld [vmem:[%s1 + $0x18] sm:$0xff]
        %v641 = vld [vmem:[%s1 + $0x20] sm:$0xff]
        %v642 = vld [vmem:[%s1 + $0x28] sm:$0xff]
        %v643 = vld [vmem:[%s1 + $0x30] sm:$0xff]
        %v644 = vld [vmem:[%s1 + $0x38] sm:$0xff]
        %v645 = vmul.f32 %v510, %v637
        %v646 = vmul.f32 %v513, %v638
        %v647 = vmul.f32 %v516, %v639
        %v648 = vmul.f32 %v519, %v640
        %v649 = vmul.f32 %v522, %v641
        %v650 = vmul.f32 %v525, %v642
        %v651 = vmul.f32 %v528, %v643
        %v652 = vmul.f32 %v531, %v644
        %v653 = vmul.f32 %v614, %v637
        %v654 = vmul.f32 %v617, %v638
        %v655 = vmul.f32 %v620, %v639
        %v656 = vmul.f32 %v623, %v640
        %v657 = vmul.f32 %v626, %v641
        %v658 = vmul.f32 %v629, %v642
        %v659 = vmul.f32 %v632, %v643
        %v660 = vmul.f32 %v635, %v644
        %vm661 = vcmask 523264
        %v662 = vsel %vm661, %v426, 0
        %664 = vmatpush.msra.mxu0 0.0
        %665 = vmatpush.msra.mxu0 0.0
        %666 = vmatpush.msra.mxu0 0.0
        %667 = vmatpush.msra.mxu0 0.0
        %668 = vmatpush.msra.mxu0 0.0
        %669 = vmatpush.msra.mxu0 0.0
        %670 = vmatpush.msra.mxu0 0.0
        %671 = vmatpush.msra.mxu0 0.0
        %672 = vmatpush.msra.mxu0 %v652
        %673 = vmatpush.msra.mxu0 %v651
        %674 = vmatpush.msra.mxu0 %v650
        %675 = vmatpush.msra.mxu0 %v649
        %676 = vmatpush.msra.mxu0 %v648
        %677 = vmatpush.msra.mxu0 %v647
        %678 = vmatpush.msra.mxu0 %v646
        %679 = vmatpush.msra.mxu0 %v645
        %680 = vmatmul.f32.gmra.mxu0 %v662
        %v681 = vpop.f32.mrf.mxu0
        %v682 = vadd.f32 0.0, %v681
        %683 = vdwg.mxu0
        %v684 = vsel %vm661, %v427, 0
        %686 = vmatpush.msra.mxu0 0.0
        %687 = vmatpush.msra.mxu0 0.0
        %688 = vmatpush.msra.mxu0 0.0
        %689 = vmatpush.msra.mxu0 0.0
        %690 = vmatpush.msra.mxu0 0.0
        %691 = vmatpush.msra.mxu0 0.0
        %692 = vmatpush.msra.mxu0 0.0
        %693 = vmatpush.msra.mxu0 0.0
        %694 = vmatpush.msra.mxu0 %v660
        %695 = vmatpush.msra.mxu0 %v659
        %696 = vmatpush.msra.mxu0 %v658
        %697 = vmatpush.msra.mxu0 %v657
        %698 = vmatpush.msra.mxu0 %v656
        %699 = vmatpush.msra.mxu0 %v655
        %700 = vmatpush.msra.mxu0 %v654
        %701 = vmatpush.msra.mxu0 %v653
        %702 = vmatmul.f32.gmra.mxu0 %v684
        %v703 = vpop.f32.mrf.mxu0
        %v704 = vadd.f32 0.0, %v703
        %705 = vdwg.mxu0
        %v706 = vld [vmem:[%s223 + $0x100] sm:$0xff]
        %v707 = vld [vmem:[%s223 + $0x108] sm:$0xff]
        %v708 = vld [vmem:[%s223 + $0x110] sm:$0xff]
        %v709 = vld [vmem:[%s223 + $0x118] sm:$0xff]
        %v710 = vld [vmem:[%s264 + $0x3] sm:$0x1]
        %v711 = vperm.slane %v710, 0
        %v713 = vsel %vm283, %v682, 0
        %v716 = vsel %vm283, %v704, 0
        %718 = vmatpush.msra.mxu0 0.0
        %719 = vmatpush.msra.mxu0 0.0
        %720 = vmatpush.msra.mxu0 0.0
        %721 = vmatpush.msra.mxu0 0.0
        %722 = vmatpush.msra.mxu0 0.0
        %723 = vmatpush.msra.mxu0 0.0
        %724 = vmatpush.msra.mxu0 0.0
        %725 = vmatpush.msra.mxu0 0.0
        %726 = vmatpush.msra.mxu0 0.0
        %727 = vmatpush.msra.mxu0 0.0
        %728 = vmatpush.msra.mxu0 0.0
        %729 = vmatpush.msra.mxu0 0.0
        %730 = vmatpush.msra.mxu0 %v709
        %731 = vmatpush.msra.mxu0 %v708
        %732 = vmatpush.msra.mxu0 %v707
        %733 = vmatpush.msra.mxu0 %v706
        %734 = vmatmul.f32.gmra.mxu0 %v713
        %v735 = vpop.f32.mrf.mxu0
        %v736 = vadd.f32 %v711, %v735
        %737 = vmatmul.f32.gmra.mxu0 %v716
        %v738 = vpop.f32.mrf.mxu0
        %v739 = vadd.f32 %v711, %v738
        %740 = vdwg.mxu0
        %v741 = vadd.f32 %v275, %v736
        %v742 = vadd.f32 %v276, %v739
        %v743 = vsel %vm283, %v741, 0.0
        %744 = vadd.xlane.f32.xlu0 %v743
        %v745 = vpop.xlane.xlu0 %744
        %v746 = vsel %vm283, %v742, 0.0
        %747 = vadd.xlane.f32.xlu0 %v746
        %v748 = vpop.xlane.xlu0 %747
        %v749 = vrcp.pop 32.0
        %v750 = vmul.f32 32.0, %v749
        %v751 = vsub.f32 1.0, %v750
        %v752 = vmul.f32 %v749, %v751
        %v753 = vadd.f32 %v749, %v752
        %vm754 = vweird.f32 %v749
        %v755 = vsel %vm754, %v749, %v753
        %v756 = vmul.f32 %v745, %v755
        %v757 = vmul.f32 %v748, %v755
        %v758 = vsub.f32 %v741, %v756
        %v759 = vsub.f32 %v742, %v757
        %v760 = vmul.f32 %v758, %v758
        %v761 = vmul.f32 %v759, %v759
        %v762 = vsel %vm283, %v760, 0.0
        %763 = vadd.xlane.f32.xlu0 %v762
        %v764 = vpop.xlane.xlu0 %763
        %v765 = vsel %vm283, %v761, 0.0
        %766 = vadd.xlane.f32.xlu0 %v765
        %v767 = vpop.xlane.xlu0 %766
        %v768 = vmul.f32 %v764, %v755
        %v769 = vmul.f32 %v767, %v755
        %v770 = vadd.f32 %v768, 1e-05
        %v771 = vadd.f32 %v769, 1e-05
        %v772 = vrsqrt.pop %v770
        %v773 = vmul.f32 %v772, %v770
        %v774 = vmul.f32 %v773, %v772
        %v775 = vmul.f32 0.5, %v774
        %v776 = vsub.f32 1.5, %v775
        %v777 = vmul.f32 %v772, %v776
        %vm778 = vweird.f32 %v770
        %vm779 = vweird.f32 %v772
        %vm780 = vmor %vm778, %vm779
        %v781 = vsel %vm780, %v772, %v777
        %v782 = vrsqrt.pop %v771
        %v783 = vmul.f32 %v782, %v771
        %v784 = vmul.f32 %v783, %v782
        %v785 = vmul.f32 0.5, %v784
        %v786 = vsub.f32 1.5, %v785
        %v787 = vmul.f32 %v782, %v786
        %vm788 = vweird.f32 %v771
        %vm789 = vweird.f32 %v782
        %vm790 = vmor %vm788, %vm789
        %v791 = vsel %vm790, %v782, %v787
        %v792 = vmul.f32 %v758, %v781
        %v793 = vmul.f32 %v759, %v791
        %v794 = vld [vmem:[%s264 + $0x6] sm:$0x1]
        %v795 = vperm.slane %v794, 0
        %v796 = vmul.f32 %v792, %v795
        %v797 = vmul.f32 %v793, %v795
        %v798 = vld [vmem:[%s264 + $0x7] sm:$0x1]
        %v799 = vperm.slane %v798, 0
        %v800 = vadd.f32 %v796, %v799
        %v801 = vadd.f32 %v797, %v799
        %v802 = vld [vmem:[%s223 + $0x120] sm:$0xff]
        %v803 = vld [vmem:[%s223 + $0x128] sm:$0xff]
        %v804 = vld [vmem:[%s223 + $0x130] sm:$0xff]
        %v805 = vld [vmem:[%s223 + $0x138] sm:$0xff]
        %v806 = vld [vmem:[%s264 + $0x4] sm:$0x1]
        %v807 = vperm.slane %v806, 0
        %v809 = vsel %vm283, %v800, 0
        %v812 = vsel %vm283, %v801, 0
        %814 = vmatpush.msra.mxu0 0.0
        %815 = vmatpush.msra.mxu0 0.0
        %816 = vmatpush.msra.mxu0 0.0
        %817 = vmatpush.msra.mxu0 0.0
        %818 = vmatpush.msra.mxu0 0.0
        %819 = vmatpush.msra.mxu0 0.0
        %820 = vmatpush.msra.mxu0 0.0
        %821 = vmatpush.msra.mxu0 0.0
        %822 = vmatpush.msra.mxu0 0.0
        %823 = vmatpush.msra.mxu0 0.0
        %824 = vmatpush.msra.mxu0 0.0
        %825 = vmatpush.msra.mxu0 0.0
        %826 = vmatpush.msra.mxu0 %v805
        %827 = vmatpush.msra.mxu0 %v804
        %828 = vmatpush.msra.mxu0 %v803
        %829 = vmatpush.msra.mxu0 %v802
        %830 = vmatmul.f32.gmra.mxu0 %v809
        %v831 = vpop.f32.mrf.mxu0
        %v832 = vadd.f32 %v807, %v831
        %833 = vmatmul.f32.gmra.mxu0 %v812
        %v834 = vpop.f32.mrf.mxu0
        %v835 = vadd.f32 %v807, %v834
        %836 = vdwg.mxu0
        %v837 = vmul.f32 %v832, 0.5
        %v838 = vmul.f32 %v835, 0.5
        %v839 = vmul.f32 %v832, 0.70710677
        %v840 = vmul.f32 %v835, 0.70710677
        %v841 = vmul.f32 %v839, %v839
        %v842 = vmin.f32 16.0, %v841
        %v843 = vmul.f32 %v842, 2.1237322e-06
        %v844 = vadd.f32 %v843, 0.00028619796
        %v845 = vmul.f32 %v842, %v844
        %v846 = vadd.f32 %v845, 0.0036580483
        %v847 = vmul.f32 %v842, %v846
        %v848 = vadd.f32 %v847, 0.05243302
        %v849 = vmul.f32 %v842, %v848
        %v850 = vadd.f32 %v849, 0.18741608
        %v851 = vmul.f32 %v842, %v850
        %v852 = vadd.f32 %v851, 1.1283791
        %v853 = vmul.f32 %v839, %v852
        %v854 = vmul.f32 %v842, 3.8918573e-05
        %v855 = vadd.f32 %v854, 0.001143296
        %v856 = vmul.f32 %v842, %v855
        %v857 = vadd.f32 %v856, 0.014752088
        %v858 = vmul.f32 %v842, %v857
        %v859 = vadd.f32 %v858, 0.112945676
        %v860 = vmul.f32 %v842, %v859
        %v861 = vadd.f32 %v860, 0.4994258
        %v862 = vmul.f32 %v842, %v861
        %v863 = vadd.f32 %v862, 1.0
        %v864 = vrcp.pop %v863
        %v865 = vmul.f32 %v863, %v864
        %v866 = vsub.f32 1.0, %v865
        %v867 = vmul.f32 %v864, %v866
        %v868 = vadd.f32 %v864, %v867
        %vm869 = vweird.f32 %v863
        %vm870 = vweird.f32 %v864
        %vm871 = vmor %vm869, %vm870
        %v872 = vsel %vm871, %v864, %v868
        %v873 = vand.u32 2147483647, %v863
        %vm874 = vcmp.eq.f32.partialorder %v873, 8.507059e+37
        %v875 = vand.u32 %v863, 2147483648
        %v876 = vor.u32 1.1754944e-38, %v875
        %v877 = vsel %vm874, %v876, %v872
        %v878 = vmul.f32 %v853, %v877
        %v879 = vmin.f32 %v878, 1.0
        %v880 = vmax.f32 %v879, -1.0
        %v881 = vmul.f32 %v840, %v840
        %v882 = vmin.f32 16.0, %v881
        %v883 = vmul.f32 %v882, 2.1237322e-06
        %v884 = vadd.f32 %v883, 0.00028619796
        %v885 = vmul.f32 %v882, %v884
        %v886 = vadd.f32 %v885, 0.0036580483
        %v887 = vmul.f32 %v882, %v886
        %v888 = vadd.f32 %v887, 0.05243302
        %v889 = vmul.f32 %v882, %v888
        %v890 = vadd.f32 %v889, 0.18741608
        %v891 = vmul.f32 %v882, %v890
        %v892 = vadd.f32 %v891, 1.1283791
        %v893 = vmul.f32 %v840, %v892
        %v894 = vmul.f32 %v882, 3.8918573e-05
        %v895 = vadd.f32 %v894, 0.001143296
        %v896 = vmul.f32 %v882, %v895
        %v897 = vadd.f32 %v896, 0.014752088
        %v898 = vmul.f32 %v882, %v897
        %v899 = vadd.f32 %v898, 0.112945676
        %v900 = vmul.f32 %v882, %v899
        %v901 = vadd.f32 %v900, 0.4994258
        %v902 = vmul.f32 %v882, %v901
        %v903 = vadd.f32 %v902, 1.0
        %v904 = vrcp.pop %v903
        %v905 = vmul.f32 %v903, %v904
        %v906 = vsub.f32 1.0, %v905
        %v907 = vmul.f32 %v904, %v906
        %v908 = vadd.f32 %v904, %v907
        %vm909 = vweird.f32 %v903
        %vm910 = vweird.f32 %v904
        %vm911 = vmor %vm909, %vm910
        %v912 = vsel %vm911, %v904, %v908
        %v913 = vand.u32 2147483647, %v903
        %vm914 = vcmp.eq.f32.partialorder %v913, 8.507059e+37
        %v915 = vand.u32 %v903, 2147483648
        %v916 = vor.u32 1.1754944e-38, %v915
        %v917 = vsel %vm914, %v916, %v912
        %v918 = vmul.f32 %v893, %v917
        %v919 = vmin.f32 %v918, 1.0
        %v920 = vmax.f32 %v919, -1.0
        %v921 = vadd.f32 %v880, 1.0
        %v922 = vadd.f32 %v920, 1.0
        %v923 = vmul.f32 %v837, %v921
        %v924 = vmul.f32 %v838, %v922
        %v925 = vld [vmem:[%s223 + $0x140] sm:$0xff]
        %v926 = vld [vmem:[%s223 + $0x148] sm:$0xff]
        %v927 = vld [vmem:[%s223 + $0x150] sm:$0xff]
        %v928 = vld [vmem:[%s223 + $0x158] sm:$0xff]
        %v929 = vld [vmem:[%s223 + $0x160] sm:$0xff]
        %v930 = vld [vmem:[%s223 + $0x168] sm:$0xff]
        %v931 = vld [vmem:[%s223 + $0x170] sm:$0xff]
        %v932 = vld [vmem:[%s223 + $0x178] sm:$0xff]
        %v933 = vld [vmem:[%s264 + $0x5] sm:$0x1]
        %v934 = vperm.slane %v933, 0
        %v936 = vsel %vm661, %v923, 0
        %v939 = vsel %vm661, %v924, 0
        %941 = vmatpush.msra.mxu0 0.0
        %942 = vmatpush.msra.mxu0 0.0
        %943 = vmatpush.msra.mxu0 0.0
        %944 = vmatpush.msra.mxu0 0.0
        %945 = vmatpush.msra.mxu0 0.0
        %946 = vmatpush.msra.mxu0 0.0
        %947 = vmatpush.msra.mxu0 0.0
        %948 = vmatpush.msra.mxu0 0.0
        %949 = vmatpush.msra.mxu0 %v932
        %950 = vmatpush.msra.mxu0 %v931
        %951 = vmatpush.msra.mxu0 %v930
        %952 = vmatpush.msra.mxu0 %v929
        %953 = vmatpush.msra.mxu0 %v928
        %954 = vmatpush.msra.mxu0 %v927
        %955 = vmatpush.msra.mxu0 %v926
        %956 = vmatpush.msra.mxu0 %v925
        %957 = vmatmul.f32.gmra.mxu0 %v936
        %v958 = vpop.f32.mrf.mxu0
        %v959 = vadd.f32 %v934, %v958
        %960 = vmatmul.f32.gmra.mxu0 %v939
        %v961 = vpop.f32.mrf.mxu0
        %v962 = vadd.f32 %v934, %v961
        %963 = vdwg.mxu0
        %v964 = vadd.f32 %v800, %v959
        %v965 = vadd.f32 %v801, %v962
        %v966 = vsel %vm283, %v964, 0.0
        %967 = vadd.xlane.f32.xlu0 %v966
        %v968 = vpop.xlane.xlu0 %967
        %v969 = vsel %vm283, %v965, 0.0
        %970 = vadd.xlane.f32.xlu0 %v969
        %v971 = vpop.xlane.xlu0 %970
        %v972 = vmul.f32 %v968, %v755
        %v973 = vmul.f32 %v971, %v755
        %v974 = vsub.f32 %v964, %v972
        %v975 = vsub.f32 %v965, %v973
        %v976 = vmul.f32 %v974, %v974
        %v977 = vmul.f32 %v975, %v975
        %v978 = vsel %vm283, %v976, 0.0
        %979 = vadd.xlane.f32.xlu0 %v978
        %v980 = vpop.xlane.xlu0 %979
        %v981 = vsel %vm283, %v977, 0.0
        %982 = vadd.xlane.f32.xlu0 %v981
        %v983 = vpop.xlane.xlu0 %982
        %v984 = vmul.f32 %v980, %v755
        %v985 = vmul.f32 %v983, %v755
        %v986 = vadd.f32 %v984, 1e-05
        %v987 = vadd.f32 %v985, 1e-05
        %v988 = vrsqrt.pop %v986
        %v989 = vmul.f32 %v988, %v986
        %v990 = vmul.f32 %v989, %v988
        %v991 = vmul.f32 0.5, %v990
        %v992 = vsub.f32 1.5, %v991
        %v993 = vmul.f32 %v988, %v992
        %vm994 = vweird.f32 %v986
        %vm995 = vweird.f32 %v988
        %vm996 = vmor %vm994, %vm995
        %v997 = vsel %vm996, %v988, %v993
        %v998 = vrsqrt.pop %v987
        %v999 = vmul.f32 %v998, %v987
        %v1000 = vmul.f32 %v999, %v998
        %v1001 = vmul.f32 0.5, %v1000
        %v1002 = vsub.f32 1.5, %v1001
        %v1003 = vmul.f32 %v998, %v1002
        %vm1004 = vweird.f32 %v987
        %vm1005 = vweird.f32 %v998
        %vm1006 = vmor %vm1004, %vm1005
        %v1007 = vsel %vm1006, %v998, %v1003
        %v1008 = vmul.f32 %v974, %v997
        %v1009 = vmul.f32 %v975, %v1007
        %v1010 = vld [vmem:[%s264 + $0x8] sm:$0x1]
        %v1011 = vperm.slane %v1010, 0
        %v1012 = vmul.f32 %v1008, %v1011
        %v1013 = vmul.f32 %v1009, %v1011
        %v1014 = vld [vmem:[%s264 + $0x9] sm:$0x1]
        %v1015 = vperm.slane %v1014, 0
        %v1016 = vadd.f32 %v1012, %v1015
        %v1017 = vadd.f32 %v1013, %v1015
        %1018 = vst.msk [vmem:[#allocation2] sm:$0xff] %vm283, %v1016
        %1019 = vst.msk [vmem:[#allocation2 + $0x8] sm:$0xff] %vm283, %v1017
        %p1020 = scmp.eq.s32.totalorder %s24, 1
        // Predicated region
        $region45: #{tpu_custom_call.1} parent=35 // pred_check
          %p1021 = pneg %p1020
        $region46: #{tpu_custom_call.1} parent=35 // pred_check_branch
          %1023 = sbr.rel (%p1021) target = $region48
        $region47: #{tpu_custom_call.1} parent=35 // pred_region
          %1024 = vst.msk [vmem:[#allocation6] sm:$0xff] %vm283, %v1016
          %1025 = vst.msk [vmem:[#allocation6 + $0x8] sm:$0xff] %vm283, %v1017
        $region48: #{tpu_custom_call.1} parent=35 // pred_fallthru
          _
        // Predicated region
        $region49: #{tpu_custom_call.1} parent=35 // pred_check
          %p1026 = pneg %p148
        $region50: #{tpu_custom_call.1} parent=35 // pred_check_branch
          %1028 = sbr.rel (%p1026) target = $region52
        $region51: #{tpu_custom_call.1} parent=35 // pred_region
          %s1029 = smul.u32 2, %s23
          %1031 = vsyncadd [#allocation5], 0
          %s1032 = smul.addr %s1029, 8
          %s1033 = scalar_lea.hbm %s4, %s1032
          %s1034 = sshll.u32 [#allocation6], 4
          %s1035 = int_to_ptr.vmem [resolvable:$true] %s1034
          %s1036 = sshll.u32 %s1033, 4
          %s1037 = int_to_ptr.hbm [resolvable:$true] %s1036
          %1042 = dma.vmem_to_hbm [thread:$0]  %s1035, 256, %s1037, [#allocation5], 128, 128, 8
        $region52: #{tpu_custom_call.1} parent=35 // pred_fallthru
          _
        // Predicated region
        $region53: #{tpu_custom_call.1} parent=35 // pred_check
          %p1043 = pneg %p148
        $region54: #{tpu_custom_call.1} parent=35 // pred_check_branch
          %1045 = sbr.rel (%p1043) target = $region56
        $region55: #{tpu_custom_call.1} parent=35 // pred_region
          %1047 = dma.done [#allocation5], 256
        $region56: #{tpu_custom_call.1} parent=35 // pred_fallthru
          _
      $region36: #{tpu_custom_call.1} parent=5 // pred_fallthru
        _
      %p1048 = scmp.le.s32.totalorder 2, %s14
      // Predicated region
      $region57: #{tpu_custom_call.1} parent=5 // pred_check
        %p1049 = pneg %p1048
      $region58: #{tpu_custom_call.1} parent=5 // pred_check_branch
        %1051 = sbr.rel (%p1049) target = $region60
      $region59: #{tpu_custom_call.1} parent=5 // pred_region
        %s1052 = ssub.s32 %s14, 2
      $region60: #{tpu_custom_call.1} parent=5 // pred_fallthru
        _
    $region6: #{tpu_custom_call.1} parent=1 // loop_footer
      %s18 = sadd.s32 1, %s14
    $region7: #{tpu_custom_call.1} parent=1 // loop_footer_branch
      %13 = sbr.rel target = $region3
    $region8: #{tpu_custom_call.1} parent=1 // loop_exit
      _
    %1053 = vsyncpa [#allocation4], 1
    %s1054 = scalar_lea.sflag [#allocation4], 1
    %1055 = vsyncpa %s1054, 1
    %1056 = vsyncpa [#allocation5], 1
    %s1057 = scalar_lea.sflag [#allocation5], 1
    %1058 = vsyncpa %s1057, 1

</llo_original>
